<compile_context>
chip_gen: v7x
topology: tpu7x:2x2x1
jax: 0.10.0
libtpu: 0.0.40
codegen_flags: <defaults>
</compile_context>

<pallas_src>
import jax
import jax.numpy as jnp
from jax.experimental import pallas as pl
from jax.experimental.pallas import tpu as pltpu


def _round_up(x: int, m: int) -> int:
    return (x + m - 1) // m * m


def zhangnet_kernel(x_ref, w1_ref, b1_ref, w2_ref, b2_ref, out_ref):
    # First linear (weighter already folded into w1): (TB, bands) @ (bands, HP)
    h = jnp.dot(x_ref[...], w1_ref[...], preferred_element_type=jnp.float32)
    h = h + b1_ref[...]

    # LeakyReLU, negative_slope = 0.01 (PyTorch default). f32 elementwise.
    h = jnp.maximum(h, 0.01 * h)

    # Second linear: (TB, HP) @ (HP, C). Cast h to the weight dtype so an
    # optional bf16 parameter path (v5e) feeds the MXU with bf16 operands;
    # with f32 weights this cast is a no-op.
    out = jnp.dot(h.astype(w2_ref.dtype), w2_ref[...],
                  preferred_element_type=jnp.float32)
    out_ref[...] = (out + b2_ref[...]).astype(out_ref.dtype)


def prepare_params(weighter, w1, b1, w2, b2, *, mxu_dtype=jnp.float32):
    """One-time parameter prep: fold the spectral re-weighting into W1
    ((x*w) @ W1 == x @ (diag(w) @ W1)) and zero-pad the hidden dim to a
    lane-aligned width.  Call once per weight set (or jit the whole forward
    so this const-folds)."""
    bands, hidden = w1.shape
    n_classes = w2.shape[1]
    HP = _round_up(hidden, 128)
    f32 = jnp.float32

    w1_eff = weighter.astype(f32)[:, None] * w1.astype(f32)
    w1p = jnp.zeros((bands, HP), mxu_dtype).at[:, :hidden].set(
        w1_eff.astype(mxu_dtype))
    b1p = jnp.zeros((1, HP), f32).at[:, :hidden].set(b1.astype(f32))
    w2p = jnp.zeros((HP, n_classes), mxu_dtype).at[:hidden, :].set(
        w2.astype(mxu_dtype))
    b2p = b2.astype(f32).reshape(1, n_classes)
    return w1p, b1p, w2p, b2p


def zhangnet_apply(x, w1p, b1p, w2p, b2p, *, tb=4096):
    """Fused (x @ W1 + b1 -> LeakyReLU -> @ W2 + b2) on prepared params."""
    B, bands = x.shape
    HP = w1p.shape[1]
    n_classes = w2p.shape[1]
    f32 = jnp.float32

    # Batch tile: multiple of 8, capped so the grid has >= 2 steps (megacore).
    TB = max(8, min(_round_up(tb, 8), _round_up(pl.cdiv(B, 2), 8)))
    grid = (pl.cdiv(B, TB),)  # ragged last block is masked by Pallas

    xp = x.astype(w1p.dtype)
    x_item = jnp.dtype(w1p.dtype).itemsize

    # VMEM budget: double-buffered x/out blocks + resident weights + f32 temps.
    vmem_needed = (
        2 * TB * bands * x_item
        + 2 * TB * n_classes * 4
        + 2 * (bands * HP * x_item + HP * 4)
        + 2 * (HP * n_classes * x_item + n_classes * 4)
        + 2 * TB * HP * 4
    )
    vmem_limit = min(56 * 1024 * 1024,
                     max(32 * 1024 * 1024, int(vmem_needed * 1.5)))

    cost = pl.CostEstimate(
        flops=2 * B * (bands * HP + HP * n_classes),
        transcendentals=0,
        bytes_accessed=(B * bands * x_item + B * n_classes * 4
                        + bands * HP * x_item + HP * 4
                        + HP * n_classes * x_item + n_classes * 4),
    )

    out = pl.pallas_call(
        zhangnet_kernel,
        out_shape=jax.ShapeDtypeStruct((B, n_classes), f32),
        grid_spec=pl.GridSpec(
            grid=grid,
            in_specs=[
                pl.BlockSpec((TB, bands), lambda i: (i, 0)),        # x tile
                pl.BlockSpec((bands, HP), lambda i: (0, 0)),        # w1 (resident)
                pl.BlockSpec((1, HP), lambda i: (0, 0)),            # b1 (resident)
                pl.BlockSpec((HP, n_classes), lambda i: (0, 0)),    # w2 (resident)
                pl.BlockSpec((1, n_classes), lambda i: (0, 0)),     # b2 (resident)
            ],
            out_specs=pl.BlockSpec((TB, n_classes), lambda i: (i, 0)),
        ),
        compiler_params=pltpu.CompilerParams(
            dimension_semantics=("parallel",),
            vmem_limit_bytes=vmem_limit,
        ),
        cost_estimate=cost,
    )(xp, w1p, b1p, w2p, b2p)

    return out.astype(x.dtype)


def zhangnet_forward(x, weighter, w1, b1, w2, b2, *, tb=4096,
                     mxu_dtype=jnp.float32):
    """Returns (weighter, weighter, output) matching the PyTorch module.
    For repeated inference, call prepare_params once and zhangnet_apply
    directly; use mxu_dtype=jnp.bfloat16 on v5e for MXU headroom."""
    prepared = prepare_params(weighter, w1, b1, w2, b2, mxu_dtype=mxu_dtype)
    output = zhangnet_apply(x, *prepared, tb=tb)
    return weighter, weighter, output


def init_params(key, bands, hidden, n_classes, dtype=jnp.float32):
    """Parameter init mimicking the module: weighter = ones/2; PyTorch-style
    uniform(-1/sqrt(fan_in), 1/sqrt(fan_in)) for the linear layers."""
    k1, k2, k3, k4 = jax.random.split(key, 4)
    weighter = jnp.ones((bands,), dtype) / 2.0

    bound1 = 1.0 / float(bands) ** 0.5
    w1 = jax.random.uniform(k1, (bands, hidden), dtype, -bound1, bound1)
    b1 = jax.random.uniform(k2, (hidden,), dtype, -bound1, bound1)

    bound2 = 1.0 / float(hidden) ** 0.5
    w2 = jax.random.uniform(k3, (hidden, n_classes), dtype, -bound2, bound2)
    b2 = jax.random.uniform(k4, (n_classes,), dtype, -bound2, bound2)
    return weighter, w1, b1, w2, b2


if __name__ == "__main__":
    bands = 32
    hidden = 100
    n_classes = 10
    batch = 200  # with tb=64: 3 full blocks + 1 ragged block of 8 rows

    key = jax.random.PRNGKey(0)
    kx, kp = jax.random.split(key)

    x = jax.random.normal(kx, (batch, bands), jnp.float32)
    weighter, w1, b1, w2, b2 = init_params(kp, bands, hidden, n_classes)

    # Small tile in the test so the grid has several steps including a ragged
    # last block; production callers keep the default tb=4096.
    w_out1, w_out2, output = zhangnet_forward(x, weighter, w1, b1, w2, b2, tb=64)
    jax.block_until_ready(output)

    # Reference check in plain JAX (same math as the PyTorch forward).
    rw = weighter * x
    h = rw @ w1 + b1
    h = jnp.where(h > 0, h, 0.01 * h)
    ref = h @ w2 + b2

    assert output.shape == (batch, n_classes)
    assert output.dtype == x.dtype
    assert jnp.allclose(output, ref, atol=1e-5, rtol=1e-4), (
        float(jnp.max(jnp.abs(output - ref)))
    )
    assert jnp.array_equal(w_out1, weighter) and jnp.array_equal(w_out2, weighter)

    print("KERNEL_OK")
</pallas_src>

<mosaic_0001>
module attributes {stable_mosaic.version = 11 : i64} {
  func.func @zhangnet_kernel(%arg0: i32, %arg1: memref<64x32xf32, #tpu.memory_space<vmem>>, %arg2: memref<32x128xf32, #tpu.memory_space<vmem>>, %arg3: memref<1x128xf32, #tpu.memory_space<vmem>>, %arg4: memref<128x10xf32, #tpu.memory_space<vmem>>, %arg5: memref<1x10xf32, #tpu.memory_space<vmem>>, %arg6: memref<64x10xf32, #tpu.memory_space<vmem>>) attributes {dimension_semantics = [#tpu.dimension_semantics<parallel>], iteration_bounds = array<i64: 4>, scalar_prefetch = 0 : i64, scratch_operands = 0 : i64, tpu.core_type = #tpu.core_type<tc>, window_params = [{transform_indices = @transform_0, window_bounds = array<i64: 64, 32>}, {pipeline_mode = #tpu.pipeline_mode<synchronous>, transform_indices = @transform_1, window_bounds = array<i64: 32, 128>}, {pipeline_mode = #tpu.pipeline_mode<synchronous>, transform_indices = @transform_2, window_bounds = array<i64: 1, 128>}, {pipeline_mode = #tpu.pipeline_mode<synchronous>, transform_indices = @transform_3, window_bounds = array<i64: 128, 10>}, {pipeline_mode = #tpu.pipeline_mode<synchronous>, transform_indices = @transform_4, window_bounds = array<i64: 1, 10>}, {transform_indices = @transform_5, window_bounds = array<i64: 64, 10>}]} {
    %c0 = arith.constant 0 : index
    %c0_0 = arith.constant 0 : index
    %0 = vector.load %arg1[%c0, %c0_0] : memref<64x32xf32, #tpu.memory_space<vmem>>, vector<64x32xf32>
    %c0_1 = arith.constant 0 : index
    %c0_2 = arith.constant 0 : index
    %1 = vector.load %arg2[%c0_1, %c0_2] : memref<32x128xf32, #tpu.memory_space<vmem>>, vector<32x128xf32>
    %cst = arith.constant dense<0.000000e+00> : vector<64x128xf32>
    %2 = tpu.matmul %0, %1, %cst {dimension_numbers = #tpu.dot_dimension_numbers<[1], [0], [0], [1], [0, 0, 1, 1], [], []>} : vector<64x32xf32>, vector<32x128xf32>, vector<64x128xf32> -> vector<64x128xf32>
    %c0_3 = arith.constant 0 : index
    %c0_4 = arith.constant 0 : index
    %3 = vector.load %arg3[%c0_3, %c0_4] : memref<1x128xf32, #tpu.memory_space<vmem>>, vector<1x128xf32>
    %4 = vector.broadcast %3 : vector<1x128xf32> to vector<64x128xf32>
    %5 = arith.addf %2, %4 : vector<64x128xf32>
    %cst_5 = arith.constant 0.00999999977 : f32
    %6 = vector.broadcast %cst_5 : f32 to vector<64x128xf32>
    %7 = arith.mulf %6, %5 : vector<64x128xf32>
    %8 = arith.maximumf %5, %7 : vector<64x128xf32>
    %c0_6 = arith.constant 0 : index
    %c0_7 = arith.constant 0 : index
    %9 = vector.load %arg4[%c0_6, %c0_7] : memref<128x10xf32, #tpu.memory_space<vmem>>, vector<128x10xf32>
    %cst_8 = arith.constant dense<0.000000e+00> : vector<64x10xf32>
    %10 = tpu.matmul %8, %9, %cst_8 {dimension_numbers = #tpu.dot_dimension_numbers<[1], [0], [0], [1], [0, 0, 1, 1], [], []>} : vector<64x128xf32>, vector<128x10xf32>, vector<64x10xf32> -> vector<64x10xf32>
    %c0_9 = arith.constant 0 : index
    %c0_10 = arith.constant 0 : index
    %11 = vector.load %arg5[%c0_9, %c0_10] : memref<1x10xf32, #tpu.memory_space<vmem>>, vector<1x10xf32>
    %12 = vector.broadcast %11 : vector<1x10xf32> to vector<64x10xf32>
    %13 = arith.addf %10, %12 : vector<64x10xf32>
    %c0_11 = arith.constant 0 : index
    %c0_12 = arith.constant 0 : index
    %14 = vector.load %arg6[%c0_11, %c0_12] : memref<64x10xf32, #tpu.memory_space<vmem>>, vector<64x10xf32>
    tpu.vector_store %arg6[%c0_11, %c0_12], %13 {strides = array<i32>} : memref<64x10xf32, #tpu.memory_space<vmem>>, vector<64x10xf32>,
    return
  }
  func.func @transform_0(%arg0: i32) -> (i32, i32) {
    %c0_i32 = arith.constant 0 : i32
    %c0_i32_0 = arith.constant 0 : i32
    return %arg0, %c0_i32 : i32, i32
  }
  func.func @transform_1(%arg0: i32) -> (i32, i32) {
    %c0_i32 = arith.constant 0 : i32
    %c0_i32_0 = arith.constant 0 : i32
    %c0_i32_1 = arith.constant 0 : i32
    return %c0_i32, %c0_i32_0 : i32, i32
  }
  func.func @transform_2(%arg0: i32) -> (i32, i32) {
    %c0_i32 = arith.constant 0 : i32
    %c0_i32_0 = arith.constant 0 : i32
    %c0_i32_1 = arith.constant 0 : i32
    return %c0_i32, %c0_i32_0 : i32, i32
  }
  func.func @transform_3(%arg0: i32) -> (i32, i32) {
    %c0_i32 = arith.constant 0 : i32
    %c0_i32_0 = arith.constant 0 : i32
    %c0_i32_1 = arith.constant 0 : i32
    return %c0_i32, %c0_i32_0 : i32, i32
  }
  func.func @transform_4(%arg0: i32) -> (i32, i32) {
    %c0_i32 = arith.constant 0 : i32
    %c0_i32_0 = arith.constant 0 : i32
    %c0_i32_1 = arith.constant 0 : i32
    return %c0_i32, %c0_i32_0 : i32, i32
  }
  func.func @transform_5(%arg0: i32) -> (i32, i32) {
    %c0_i32 = arith.constant 0 : i32
    %c0_i32_0 = arith.constant 0 : i32
    return %arg0, %c0_i32 : i32, i32
  }
}

</mosaic_0001>

<llo_original>
// kernel: tpu_custom_call.1
$region0: #{tpu_custom_call.1}
  #allocation0 [shape = 'u32[]', space=smem, size = 0x4, offset = 0x4, fixed_abs, tag = 'smem constant byte address 0x4 - core index']
  #allocation1 [shape = 'u32[144,128]{1,0:T(1,128)}', space=vmem, size = 0x12000, scoped, tag = 'internal scratch']
  %s0 = inlined_call_operand.vmem [shape: f32[200,32], index: 0, kind: input, shape index: {}]
  %s1 = inlined_call_operand.vmem [shape: f32[32,128], index: 1, kind: input, shape index: {}]
  %s2 = inlined_call_operand.vmem [shape: f32[1,128], index: 2, kind: input, shape index: {}]
  %s3 = inlined_call_operand.vmem [shape: f32[128,10], index: 3, kind: input, shape index: {}]
  %s4 = inlined_call_operand.vmem [shape: f32[1,10], index: 4, kind: input, shape index: {}]
  %s5 = inlined_call_operand.vmem [shape: f32[200,10], index: 5, kind: output, shape index: {}]
  %s6 = sld [smem:[#allocation0]]
  $region101: #{tpu_custom_call.1} parent=0
    _
  %s8 = ssub.s32 1, %s6
  %s9 = scalar_select 0, %s8, %s6
  $region1: #{tpu_custom_call.1} parent=0
    #allocation2 [shape = 'u8[65536]{0}', space=vmem, size = 0x10000, scoped, tag = 'output window, operand 0']
    loop: start=0, step=1, limit=6
    $region2: #{tpu_custom_call.1} parent=1 // loop_pre_header
      _
    $region3: #{tpu_custom_call.1} parent=1 // loop_header
      %s11 = sphi 0, %s15
      %p12 = scmp.ge.s32.totalorder %s11, 6
      %s21 = sphi 0, %s23
      %s24 = sphi 0, %s21
      %s25 = sphi 0, %s24
      %s41 = sphi 0, %s25
      %s45 = sphi 0, %s45
      %s47 = sphi 0, %s45
      %s48 = sphi 0, %s47
      %s62 = sphi 0, %s48
      %s66 = sphi 0, %s66
      %s68 = sphi 0, %s66
      %s69 = sphi 0, %s68
      %s83 = sphi 0, %s69
      %s87 = sphi 0, %s87
      %s89 = sphi 0, %s87
      %s90 = sphi 0, %s89
      %s104 = sphi 0, %s90
      %s108 = sphi 0, %s108
      %s110 = sphi 0, %s108
      %s111 = sphi 0, %s110
      %s125 = sphi 0, %s111
      %s131 = sphi 0, %s133
      %s134 = sphi 0, %s131
      %s135 = sphi 0, %s134
      %s151 = sphi 0, %s135
    $region4: #{tpu_custom_call.1} parent=1 // loop_header_branch
      %14 = sbr.rel (%p12) target = $region8
    $region5: #{tpu_custom_call.1} parent=1 // loop_body
      %s16 = ssub.s32 %s11, 1
      %s17 = ssub.s32 %s11, 2
      %s18 = sadd.s32 %s11, 1
      %s19 = ssub.s32 %s11, %s18
      %p20 = scmp.eq.s32.totalorder %s19, 0
      %s22 = sadd.s32 %s21, 1
      %s23 = scalar_select %p20, %s21, %s22
      %p26 = pneg %p20
      %p27 = scmp.eq.s32.totalorder %s11, 3
      %p28 = por %p26, %p27
      %p29 = scmp.ne.s32.totalorder %s21, %s24
      %p30 = scmp.eq.s32.totalorder %s11, 0
      %p31 = por %p29, %p30
      %p32 = scmp.ne.s32.totalorder %s21, %s24
      %p33 = scmp.eq.s32.totalorder %s16, 3
      %p34 = por %p32, %p33
      %p35 = scmp.ne.s32.totalorder %s24, %s25
      %p36 = scmp.eq.s32.totalorder %s16, 0
      %p37 = por %p35, %p36
      %p38 = scmp.ne.s32.totalorder %s24, %s25
      %p39 = scmp.eq.s32.totalorder %s17, 3
      %p40 = por %p38, %p39
      %p42 = scmp.ne.s32.totalorder %s25, %s41
      %p43 = scmp.eq.s32.totalorder %s17, 0
      %p44 = por %p42, %p43
      %s46 = sadd.s32 %s45, 1
      %p49 = scmp.eq.s32.totalorder %s11, 3
      %p50 = scmp.ne.s32.totalorder %s45, %s47
      %p51 = scmp.eq.s32.totalorder %s11, 0
      %p52 = por %p50, %p51
      %p53 = scmp.ne.s32.totalorder %s45, %s47
      %p54 = scmp.eq.s32.totalorder %s16, 3
      %p55 = por %p53, %p54
      %p56 = scmp.ne.s32.totalorder %s47, %s48
      %p57 = scmp.eq.s32.totalorder %s16, 0
      %p58 = por %p56, %p57
      %p59 = scmp.ne.s32.totalorder %s47, %s48
      %p60 = scmp.eq.s32.totalorder %s17, 3
      %p61 = por %p59, %p60
      %p63 = scmp.ne.s32.totalorder %s48, %s62
      %p64 = scmp.eq.s32.totalorder %s17, 0
      %p65 = por %p63, %p64
      %s67 = sadd.s32 %s66, 1
      %p70 = scmp.eq.s32.totalorder %s11, 3
      %p71 = scmp.ne.s32.totalorder %s66, %s68
      %p72 = scmp.eq.s32.totalorder %s11, 0
      %p73 = por %p71, %p72
      %p74 = scmp.ne.s32.totalorder %s66, %s68
      %p75 = scmp.eq.s32.totalorder %s16, 3
      %p76 = por %p74, %p75
      %p77 = scmp.ne.s32.totalorder %s68, %s69
      %p78 = scmp.eq.s32.totalorder %s16, 0
      %p79 = por %p77, %p78
      %p80 = scmp.ne.s32.totalorder %s68, %s69
      %p81 = scmp.eq.s32.totalorder %s17, 3
      %p82 = por %p80, %p81
      %p84 = scmp.ne.s32.totalorder %s69, %s83
      %p85 = scmp.eq.s32.totalorder %s17, 0
      %p86 = por %p84, %p85
      %s88 = sadd.s32 %s87, 1
      %p91 = scmp.eq.s32.totalorder %s11, 3
      %p92 = scmp.ne.s32.totalorder %s87, %s89
      %p93 = scmp.eq.s32.totalorder %s11, 0
      %p94 = por %p92, %p93
      %p95 = scmp.ne.s32.totalorder %s87, %s89
      %p96 = scmp.eq.s32.totalorder %s16, 3
      %p97 = por %p95, %p96
      %p98 = scmp.ne.s32.totalorder %s89, %s90
      %p99 = scmp.eq.s32.totalorder %s16, 0
      %p100 = por %p98, %p99
      %p101 = scmp.ne.s32.totalorder %s89, %s90
      %p102 = scmp.eq.s32.totalorder %s17, 3
      %p103 = por %p101, %p102
      %p105 = scmp.ne.s32.totalorder %s90, %s104
      %p106 = scmp.eq.s32.totalorder %s17, 0
      %p107 = por %p105, %p106
      %s109 = sadd.s32 %s108, 1
      %p112 = scmp.eq.s32.totalorder %s11, 3
      %p113 = scmp.ne.s32.totalorder %s108, %s110
      %p114 = scmp.eq.s32.totalorder %s11, 0
      %p115 = por %p113, %p114
      %p116 = scmp.ne.s32.totalorder %s108, %s110
      %p117 = scmp.eq.s32.totalorder %s16, 3
      %p118 = por %p116, %p117
      %p119 = scmp.ne.s32.totalorder %s110, %s111
      %p120 = scmp.eq.s32.totalorder %s16, 0
      %p121 = por %p119, %p120
      %p122 = scmp.ne.s32.totalorder %s110, %s111
      %p123 = scmp.eq.s32.totalorder %s17, 3
      %p124 = por %p122, %p123
      %p126 = scmp.ne.s32.totalorder %s111, %s125
      %p127 = scmp.eq.s32.totalorder %s17, 0
      %p128 = por %p126, %p127
      %s129 = ssub.s32 %s11, %s18
      %p130 = scmp.eq.s32.totalorder %s129, 0
      %s132 = sadd.s32 %s131, 1
      %s133 = scalar_select %p130, %s131, %s132
      %p136 = pneg %p130
      %p137 = scmp.eq.s32.totalorder %s11, 3
      %p138 = por %p136, %p137
      %p139 = scmp.ne.s32.totalorder %s131, %s134
      %p140 = scmp.eq.s32.totalorder %s11, 0
      %p141 = por %p139, %p140
      %p142 = scmp.ne.s32.totalorder %s131, %s134
      %p143 = scmp.eq.s32.totalorder %s16, 3
      %p144 = por %p142, %p143
      %p145 = scmp.ne.s32.totalorder %s134, %s135
      %p146 = scmp.eq.s32.totalorder %s16, 0
      %p147 = por %p145, %p146
      %p148 = scmp.ne.s32.totalorder %s134, %s135
      %p149 = scmp.eq.s32.totalorder %s17, 3
      %p150 = por %p148, %p149
      %p152 = scmp.ne.s32.totalorder %s135, %s151
      %p153 = scmp.eq.s32.totalorder %s17, 0
      %p154 = por %p152, %p153
      %p155 = scmp.le.s32.totalorder 1, %s11
      %p156 = scmp.lt.s32.totalorder %s11, 5
      %p157 = pnand %p155, %p156
      %p158 = pneg %p157
      // Predicated region
      $region9: #{tpu_custom_call.1} parent=5 // pred_check
        _
      $region10: #{tpu_custom_call.1} parent=5 // pred_check_branch
        %160 = sbr.rel (%p157) target = $region12
      $region11: #{tpu_custom_call.1} parent=5 // pred_region
        %s161 = ssub.s32 %s11, 1
        // Predicated region
        $region13: #{tpu_custom_call.1} parent=11 // pred_check
          %p162 = pneg %p58
        $region14: #{tpu_custom_call.1} parent=11 // pred_check_branch
          %164 = sbr.rel (%p162) target = $region16
        $region15: #{tpu_custom_call.1} parent=11 // pred_region
          _
        $region16: #{tpu_custom_call.1} parent=11 // pred_fallthru
          _
        // Predicated region
        $region17: #{tpu_custom_call.1} parent=11 // pred_check
          %p165 = pneg %p79
        $region18: #{tpu_custom_call.1} parent=11 // pred_check_branch
          %167 = sbr.rel (%p165) target = $region20
        $region19: #{tpu_custom_call.1} parent=11 // pred_region
          _
        $region20: #{tpu_custom_call.1} parent=11 // pred_fallthru
          _
        // Predicated region
        $region21: #{tpu_custom_call.1} parent=11 // pred_check
          %p168 = pneg %p100
        $region22: #{tpu_custom_call.1} parent=11 // pred_check_branch
          %170 = sbr.rel (%p168) target = $region24
        $region23: #{tpu_custom_call.1} parent=11 // pred_region
          _
        $region24: #{tpu_custom_call.1} parent=11 // pred_fallthru
          _
        // Predicated region
        $region25: #{tpu_custom_call.1} parent=11 // pred_check
          %p171 = pneg %p121
        $region26: #{tpu_custom_call.1} parent=11 // pred_check_branch
          %173 = sbr.rel (%p171) target = $region28
        $region27: #{tpu_custom_call.1} parent=11 // pred_region
          _
        $region28: #{tpu_custom_call.1} parent=11 // pred_fallthru
          _
      $region12: #{tpu_custom_call.1} parent=5 // pred_fallthru
        _
      %p174 = scmp.lt.s32.totalorder %s11, 4
      // Predicated region
      $region29: #{tpu_custom_call.1} parent=5 // pred_check
        %p175 = pneg %p174
      $region30: #{tpu_custom_call.1} parent=5 // pred_check_branch
        %177 = sbr.rel (%p175) target = $region32
      $region31: #{tpu_custom_call.1} parent=5 // pred_region
        // Predicated region
        $region33: #{tpu_custom_call.1} parent=31 // pred_check
          %p178 = pneg %p31
        $region34: #{tpu_custom_call.1} parent=31 // pred_check_branch
          %180 = sbr.rel (%p178) target = $region36
        $region35: #{tpu_custom_call.1} parent=31 // pred_region
          %s181 = smul.u32 8, %s11
          %s182 = ssub.s32 25, %s181
          %p183 = scmp.lt.s32.totalorder %s182, 8
          %s184 = scalar_select %p183, %s182, 8
          %s185 = smul.u32 128, %s184
          %p186 = scmp.lt.s32.totalorder %s181, 24
          %s187 = scalar_select %p186, %s181, 24
          %s188 = smul.addr %s187, 8
          %s189 = scalar_lea.vmem %s0, %s188
          %s190 = smul.u32 8, %s11
          %s191 = ssub.s32 25, %s190
          %p192 = scmp.lt.s32.totalorder %s191, 8
          %s193 = scalar_select %p192, %s191, 8
          %s194 = smul.u32 128, %s193
        $region36: #{tpu_custom_call.1} parent=31 // pred_fallthru
          _
      $region32: #{tpu_custom_call.1} parent=5 // pred_fallthru
        _
      %p195 = scmp.le.s32.totalorder 1, %s11
      %p196 = scmp.lt.s32.totalorder %s11, 5
      %p197 = pnand %p195, %p196
      %p198 = pneg %p197
      // Predicated region
      $region37: #{tpu_custom_call.1} parent=5 // pred_check
        _
      $region38: #{tpu_custom_call.1} parent=5 // pred_check_branch
        %200 = sbr.rel (%p197) target = $region40
      $region39: #{tpu_custom_call.1} parent=5 // pred_region
        %s201 = ssub.s32 %s11, 1
        %s202 = smul.u32 8, %s16
        %s203 = ssub.s32 25, %s202
        %p204 = scmp.lt.s32.totalorder %s203, 8
        %s205 = scalar_select %p204, %s203, 8
        %s206 = smul.u32 128, %s205
        %p207 = scmp.lt.s32.totalorder %s202, 24
        %s208 = scalar_select %p207, %s202, 24
        %s209 = smul.addr %s208, 8
        %s210 = scalar_lea.vmem %s0, %s209
        %p211 = pneg %p37
        %p212 = pneg %p34
        %p213 = pneg %p58
        %p214 = pneg %p55
        %p215 = pneg %p79
        %p216 = pneg %p76
        %p217 = pneg %p100
        %p218 = pneg %p97
        %p219 = pneg %p121
        %p220 = pneg %p118
        %p221 = pneg %p147
        %p222 = pneg %p144
        %s223 = sand.u32 %s134, 1
        %s224 = sand.u32 %s134, 1
        %s225 = smul.addr %s224, 64
        %s226 = scalar_lea.vmem [#allocation2], %s225
        %s227 = smul.u32 8, %s16
        %s228 = ssub.s32 25, %s227
        %p229 = scmp.lt.s32.totalorder %s228, 8
        %s230 = scalar_select %p229, %s228, 8
        %s231 = smul.u32 128, %s230
        %p232 = scmp.lt.s32.totalorder %s227, 24
        %s233 = scalar_select %p232, %s227, 24
        %s234 = smul.addr %s233, 8
        %s235 = scalar_lea.vmem %s0, %s234
        %s236 = smul.u32 8, %s16
        %s237 = ssub.s32 25, %s236
        %p238 = scmp.lt.s32.totalorder %s237, 8
        %s239 = scalar_select %p238, %s237, 8
        %s240 = smul.u32 128, %s239
        %s241 = smul.u32 8, %s16
        %s242 = ssub.s32 25, %s241
        %p243 = scmp.lt.s32.totalorder %s242, 8
        %s244 = scalar_select %p243, %s242, 8
        %s245 = smul.u32 128, %s244
        %v246 = vld [vmem:[%s235] sm:$0xff]
        %v247 = vld [vmem:[%s235 + $0x8] sm:$0xff]
        %v248 = vld [vmem:[%s235 + $0x10] sm:$0xff]
        %v249 = vld [vmem:[%s235 + $0x18] sm:$0xff]
        %v250 = vld [vmem:[%s235 + $0x20] sm:$0xff]
        %v251 = vld [vmem:[%s235 + $0x28] sm:$0xff]
        %v252 = vld [vmem:[%s235 + $0x30] sm:$0xff]
        %v253 = vld [vmem:[%s235 + $0x38] sm:$0xff]
        %v254 = vld [vmem:[%s1] sm:$0xff]
        %v255 = vld [vmem:[%s1 + $0x8] sm:$0xff]
        %v256 = vld [vmem:[%s1 + $0x10] sm:$0xff]
        %v257 = vld [vmem:[%s1 + $0x18] sm:$0xff]
        %v258 = vld [vmem:[%s2] sm:$0x1]
        %v260 = vlaneseq
        %v261 = vshrl.u32 %v260, 7
        %v262 = vsub.s32 0, %v261
        %v263 = vrot.slane %v258, %v262
        %vm265 = vcmask 261120
        %v267 = vsel %vm265, %v246, 0
        %v270 = vsel %vm265, %v247, 0
        %v273 = vsel %vm265, %v248, 0
        %v276 = vsel %vm265, %v249, 0
        %v279 = vsel %vm265, %v250, 0
        %v282 = vsel %vm265, %v251, 0
        %v285 = vsel %vm265, %v252, 0
        %v288 = vsel %vm265, %v253, 0
        %290 = vmatprep.subr.mxu0 0.0
        %291 = vmatpush1.msra.mxu0 %v254
        %292 = vmatprep.subr.mxu0 0.0
        %293 = vmatpush1.msra.mxu0 %v255
        %294 = vmatprep.subr.mxu0 0.0
        %295 = vmatpush1.msra.mxu0 %v256
        %296 = vmatprep.subr.mxu0 0.0
        %297 = vmatpush1.msra.mxu0 %v257
        %298 = vmatprep.subr.mxu0 0.0
        %299 = vmatpush1.msra.mxu0 0.0
        %300 = vmatprep.subr.mxu0 0.0
        %301 = vmatpush1.msra.mxu0 0.0
        %302 = vmatprep.subr.mxu0 0.0
        %303 = vmatpush1.msra.mxu0 0.0
        %304 = vmatprep.subr.mxu0 0.0
        %305 = vmatpush1.msra.mxu0 0.0
        %306 = vmatprep.subr.mxu0 0.0
        %307 = vmatpush1.msra.mxu0 0.0
        %308 = vmatprep.subr.mxu0 0.0
        %309 = vmatpush1.msra.mxu0 0.0
        %310 = vmatprep.subr.mxu0 0.0
        %311 = vmatpush1.msra.mxu0 0.0
        %312 = vmatprep.subr.mxu0 0.0
        %313 = vmatpush1.msra.mxu0 0.0
        %314 = vmatprep.subr.mxu0 0.0
        %315 = vmatpush1.msra.mxu0 0.0
        %316 = vmatprep.subr.mxu0 0.0
        %317 = vmatpush1.msra.mxu0 0.0
        %318 = vmatprep.subr.mxu0 0.0
        %319 = vmatpush1.msra.mxu0 0.0
        %320 = vmatprep.subr.mxu0 0.0
        %321 = vmatpush1.msra.mxu0 0.0
        %322 = vmatprep.subr.mxu0 0.0
        %323 = vmatpush1.msra.mxu0 0.0
        %324 = vmatprep.subr.mxu0 0.0
        %325 = vmatpush1.msra.mxu0 0.0
        %326 = vmatprep.subr.mxu0 0.0
        %327 = vmatpush1.msra.mxu0 0.0
        %328 = vmatprep.subr.mxu0 0.0
        %329 = vmatpush1.msra.mxu0 0.0
        %330 = vmatprep.subr.mxu0 0.0
        %331 = vmatpush1.msra.mxu0 0.0
        %332 = vmatprep.subr.mxu0 0.0
        %333 = vmatpush1.msra.mxu0 0.0
        %334 = vmatprep.subr.mxu0 0.0
        %335 = vmatpush1.msra.mxu0 0.0
        %336 = vmatprep.subr.mxu0 0.0
        %337 = vmatpush1.msra.mxu0 0.0
        %338 = vmatprep.subr.mxu0 0.0
        %339 = vmatpush1.msra.mxu0 0.0
        %340 = vmatprep.subr.mxu0 0.0
        %341 = vmatpush1.msra.mxu0 0.0
        %342 = vmatprep.subr.mxu0 0.0
        %343 = vmatpush1.msra.mxu0 0.0
        %344 = vmatprep.subr.mxu0 0.0
        %345 = vmatpush1.msra.mxu0 0.0
        %346 = vmatprep.subr.mxu0 0.0
        %347 = vmatpush1.msra.mxu0 0.0
        %348 = vmatprep.subr.mxu0 0.0
        %349 = vmatpush1.msra.mxu0 0.0
        %350 = vmatprep.subr.mxu0 0.0
        %351 = vmatpush1.msra.mxu0 0.0
        %352 = vmatprep.subr.mxu0 0.0
        %353 = vmatpush1.msra.mxu0 0.0
        %354 = vmatprep.mubr.f32.mxu0 0.0
        %355 = vmatmul.mubr.f32.gmra.mrb[0].mxu0 %v267
        %v356 = vpop.f32.mrb[0].mxu0
        %v357 = vadd.f32 %v263, %v356
        %v358 = vpop.f32.mrb[0].mxu0
        %359 = vmatprep.mubr.f32.mxu0 0.0
        %360 = vmatmul.mubr.f32.gmra.mrb[0].mxu0 %v270
        %v361 = vpop.f32.mrb[0].mxu0
        %v362 = vadd.f32 %v263, %v361
        %v363 = vpop.f32.mrb[0].mxu0
        %364 = vmatprep.mubr.f32.mxu0 0.0
        %365 = vmatmul.mubr.f32.gmra.mrb[0].mxu0 %v273
        %v366 = vpop.f32.mrb[0].mxu0
        %v367 = vadd.f32 %v263, %v366
        %v368 = vpop.f32.mrb[0].mxu0
        %369 = vmatprep.mubr.f32.mxu0 0.0
        %370 = vmatmul.mubr.f32.gmra.mrb[0].mxu0 %v276
        %v371 = vpop.f32.mrb[0].mxu0
        %v372 = vadd.f32 %v263, %v371
        %v373 = vpop.f32.mrb[0].mxu0
        %374 = vmatprep.mubr.f32.mxu0 0.0
        %375 = vmatmul.mubr.f32.gmra.mrb[0].mxu0 %v279
        %v376 = vpop.f32.mrb[0].mxu0
        %v377 = vadd.f32 %v263, %v376
        %v378 = vpop.f32.mrb[0].mxu0
        %379 = vmatprep.mubr.f32.mxu0 0.0
        %380 = vmatmul.mubr.f32.gmra.mrb[0].mxu0 %v282
        %v381 = vpop.f32.mrb[0].mxu0
        %v382 = vadd.f32 %v263, %v381
        %v383 = vpop.f32.mrb[0].mxu0
        %384 = vmatprep.mubr.f32.mxu0 0.0
        %385 = vmatmul.mubr.f32.gmra.mrb[0].mxu0 %v285
        %v386 = vpop.f32.mrb[0].mxu0
        %v387 = vadd.f32 %v263, %v386
        %v388 = vpop.f32.mrb[0].mxu0
        %389 = vmatprep.mubr.f32.mxu0 0.0
        %390 = vmatmul.mubr.f32.gmra.mrb[0].mxu0 %v288
        %v391 = vpop.f32.mrb[0].mxu0
        %v392 = vadd.f32 %v263, %v391
        %v393 = vpop.f32.mrb[0].mxu0
        %394 = vdwg.mxu0
        %v395 = vmul.f32 %v357, 0.01
        %v396 = vmul.f32 %v362, 0.01
        %v397 = vmul.f32 %v367, 0.01
        %v398 = vmul.f32 %v372, 0.01
        %v399 = vmul.f32 %v377, 0.01
        %v400 = vmul.f32 %v382, 0.01
        %v401 = vmul.f32 %v387, 0.01
        %v402 = vmul.f32 %v392, 0.01
        %v403 = vmax.f32 %v357, %v395
        %v404 = vmax.f32 %v362, %v396
        %v405 = vmax.f32 %v367, %v397
        %v406 = vmax.f32 %v372, %v398
        %v407 = vmax.f32 %v377, %v399
        %v408 = vmax.f32 %v382, %v400
        %v409 = vmax.f32 %v387, %v401
        %v410 = vmax.f32 %v392, %v402
        %v411 = vld [vmem:[%s3] sm:$0xff]
        %v412 = vld [vmem:[%s3 + $0x8] sm:$0xff]
        %v413 = vld [vmem:[%s3 + $0x10] sm:$0xff]
        %v414 = vld [vmem:[%s3 + $0x18] sm:$0xff]
        %v415 = vld [vmem:[%s3 + $0x20] sm:$0xff]
        %v416 = vld [vmem:[%s3 + $0x28] sm:$0xff]
        %v417 = vld [vmem:[%s3 + $0x30] sm:$0xff]
        %v418 = vld [vmem:[%s3 + $0x38] sm:$0xff]
        %v419 = vld [vmem:[%s3 + $0x40] sm:$0xff]
        %v420 = vld [vmem:[%s3 + $0x48] sm:$0xff]
        %v421 = vld [vmem:[%s3 + $0x50] sm:$0xff]
        %v422 = vld [vmem:[%s3 + $0x58] sm:$0xff]
        %v423 = vld [vmem:[%s3 + $0x60] sm:$0xff]
        %v424 = vld [vmem:[%s3 + $0x68] sm:$0xff]
        %v425 = vld [vmem:[%s3 + $0x70] sm:$0xff]
        %v426 = vld [vmem:[%s3 + $0x78] sm:$0xff]
        %v427 = vld [vmem:[%s4] sm:$0x1]
        %v429 = vlaneseq
        %v430 = vshrl.u32 %v429, 7
        %v431 = vsub.s32 0, %v430
        %v432 = vrot.slane %v427, %v431
        %434 = vmatprep.subr.mxu0 0.0
        %435 = vmatpush1.msra.mxu0 %v411
        %436 = vmatprep.subr.mxu0 0.0
        %437 = vmatpush1.msra.mxu0 %v412
        %438 = vmatprep.subr.mxu0 0.0
        %439 = vmatpush1.msra.mxu0 %v413
        %440 = vmatprep.subr.mxu0 0.0
        %441 = vmatpush1.msra.mxu0 %v414
        %442 = vmatprep.subr.mxu0 0.0
        %443 = vmatpush1.msra.mxu0 %v415
        %444 = vmatprep.subr.mxu0 0.0
        %445 = vmatpush1.msra.mxu0 %v416
        %446 = vmatprep.subr.mxu0 0.0
        %447 = vmatpush1.msra.mxu0 %v417
        %448 = vmatprep.subr.mxu0 0.0
        %449 = vmatpush1.msra.mxu0 %v418
        %450 = vmatprep.subr.mxu0 0.0
        %451 = vmatpush1.msra.mxu0 %v419
        %452 = vmatprep.subr.mxu0 0.0
        %453 = vmatpush1.msra.mxu0 %v420
        %454 = vmatprep.subr.mxu0 0.0
        %455 = vmatpush1.msra.mxu0 %v421
        %456 = vmatprep.subr.mxu0 0.0
        %457 = vmatpush1.msra.mxu0 %v422
        %458 = vmatprep.subr.mxu0 0.0
        %459 = vmatpush1.msra.mxu0 %v423
        %460 = vmatprep.subr.mxu0 0.0
        %461 = vmatpush1.msra.mxu0 %v424
        %462 = vmatprep.subr.mxu0 0.0
        %463 = vmatpush1.msra.mxu0 %v425
        %464 = vmatprep.subr.mxu0 0.0
        %465 = vmatpush1.msra.mxu0 %v426
        %466 = vmatprep.subr.mxu0 0.0
        %467 = vmatpush1.msra.mxu0 0.0
        %468 = vmatprep.subr.mxu0 0.0
        %469 = vmatpush1.msra.mxu0 0.0
        %470 = vmatprep.subr.mxu0 0.0
        %471 = vmatpush1.msra.mxu0 0.0
        %472 = vmatprep.subr.mxu0 0.0
        %473 = vmatpush1.msra.mxu0 0.0
        %474 = vmatprep.subr.mxu0 0.0
        %475 = vmatpush1.msra.mxu0 0.0
        %476 = vmatprep.subr.mxu0 0.0
        %477 = vmatpush1.msra.mxu0 0.0
        %478 = vmatprep.subr.mxu0 0.0
        %479 = vmatpush1.msra.mxu0 0.0
        %480 = vmatprep.subr.mxu0 0.0
        %481 = vmatpush1.msra.mxu0 0.0
        %482 = vmatprep.subr.mxu0 0.0
        %483 = vmatpush1.msra.mxu0 0.0
        %484 = vmatprep.subr.mxu0 0.0
        %485 = vmatpush1.msra.mxu0 0.0
        %486 = vmatprep.subr.mxu0 0.0
        %487 = vmatpush1.msra.mxu0 0.0
        %488 = vmatprep.subr.mxu0 0.0
        %489 = vmatpush1.msra.mxu0 0.0
        %490 = vmatprep.subr.mxu0 0.0
        %491 = vmatpush1.msra.mxu0 0.0
        %492 = vmatprep.subr.mxu0 0.0
        %493 = vmatpush1.msra.mxu0 0.0
        %494 = vmatprep.subr.mxu0 0.0
        %495 = vmatpush1.msra.mxu0 0.0
        %496 = vmatprep.subr.mxu0 0.0
        %497 = vmatpush1.msra.mxu0 0.0
        %498 = vmatprep.mubr.f32.mxu0 0.0
        %499 = vmatmul.mubr.f32.gmra.mrb[0].mxu0 %v403
        %v500 = vpop.f32.mrb[0].mxu0
        %v501 = vadd.f32 %v432, %v500
        %v502 = vpop.f32.mrb[0].mxu0
        %503 = vmatprep.mubr.f32.mxu0 0.0
        %504 = vmatmul.mubr.f32.gmra.mrb[0].mxu0 %v404
        %v505 = vpop.f32.mrb[0].mxu0
        %v506 = vadd.f32 %v432, %v505
        %v507 = vpop.f32.mrb[0].mxu0
        %508 = vmatprep.mubr.f32.mxu0 0.0
        %509 = vmatmul.mubr.f32.gmra.mrb[0].mxu0 %v405
        %v510 = vpop.f32.mrb[0].mxu0
        %v511 = vadd.f32 %v432, %v510
        %v512 = vpop.f32.mrb[0].mxu0
        %513 = vmatprep.mubr.f32.mxu0 0.0
        %514 = vmatmul.mubr.f32.gmra.mrb[0].mxu0 %v406
        %v515 = vpop.f32.mrb[0].mxu0
        %v516 = vadd.f32 %v432, %v515
        %v517 = vpop.f32.mrb[0].mxu0
        %518 = vmatprep.mubr.f32.mxu0 0.0
        %519 = vmatmul.mubr.f32.gmra.mrb[0].mxu0 %v407
        %v520 = vpop.f32.mrb[0].mxu0
        %v521 = vadd.f32 %v432, %v520
        %v522 = vpop.f32.mrb[0].mxu0
        %523 = vmatprep.mubr.f32.mxu0 0.0
        %524 = vmatmul.mubr.f32.gmra.mrb[0].mxu0 %v408
        %v525 = vpop.f32.mrb[0].mxu0
        %v526 = vadd.f32 %v432, %v525
        %v527 = vpop.f32.mrb[0].mxu0
        %528 = vmatprep.mubr.f32.mxu0 0.0
        %529 = vmatmul.mubr.f32.gmra.mrb[0].mxu0 %v409
        %v530 = vpop.f32.mrb[0].mxu0
        %v531 = vadd.f32 %v432, %v530
        %v532 = vpop.f32.mrb[0].mxu0
        %533 = vmatprep.mubr.f32.mxu0 0.0
        %534 = vmatmul.mubr.f32.gmra.mrb[0].mxu0 %v410
        %v535 = vpop.f32.mrb[0].mxu0
        %v536 = vadd.f32 %v432, %v535
        %v537 = vpop.f32.mrb[0].mxu0
        %538 = vdwg.mxu0
        %vm539 = vcmask 80896
        %540 = vst.msk [vmem:[%s226] sm:$0xff] %vm539, %v501
        %541 = vst.msk [vmem:[%s226 + $0x8] sm:$0xff] %vm539, %v506
        %542 = vst.msk [vmem:[%s226 + $0x10] sm:$0xff] %vm539, %v511
        %543 = vst.msk [vmem:[%s226 + $0x18] sm:$0xff] %vm539, %v516
        %544 = vst.msk [vmem:[%s226 + $0x20] sm:$0xff] %vm539, %v521
        %545 = vst.msk [vmem:[%s226 + $0x28] sm:$0xff] %vm539, %v526
        %546 = vst.msk [vmem:[%s226 + $0x30] sm:$0xff] %vm539, %v531
        %547 = vst.msk [vmem:[%s226 + $0x38] sm:$0xff] %vm539, %v536
        %s548 = sand.u32 %s134, 1
        %s549 = sand.u32 %s134, 1
        %s550 = smul.addr %s549, 64
        %s551 = scalar_lea.vmem [#allocation2], %s550
        // Predicated region
        $region41: #{tpu_custom_call.1} parent=39 // pred_check
          %p552 = pneg %p144
        $region42: #{tpu_custom_call.1} parent=39 // pred_check_branch
          %554 = sbr.rel (%p552) target = $region44
        $region43: #{tpu_custom_call.1} parent=39 // pred_region
          %s555 = smul.u32 8, %s16
          %s556 = ssub.s32 25, %s555
          %p557 = scmp.lt.s32.totalorder %s556, 8
          %s558 = scalar_select %p557, %s556, 8
          %s559 = smul.u32 128, %s558
          %p560 = scmp.ne.s32.totalorder 0, %s559
          %s561 = smul.addr %s555, 8
          %s562 = scalar_lea.vmem %s5, %s561
          // Predicated region
          $region45: #{tpu_custom_call.1} parent=43 // pred_check
            %p563 = pneg %p560
          $region46: #{tpu_custom_call.1} parent=43 // pred_check_branch
            %565 = sbr.rel (%p563) target = $region48
          $region47: #{tpu_custom_call.1} parent=43 // pred_region
            // Predicated region
            $region49: #{tpu_custom_call.1} parent=47 // pred_check
              _
            $region50: #{tpu_custom_call.1} parent=47 // pred_check_branch
              %567 = sbr.rel (0) target = $region52
            $region51: #{tpu_custom_call.1} parent=47 // pred_region
              // Predicated region
              $region71: #{tpu_custom_call.1} parent=51 // pred_check
                _
              $region72: #{tpu_custom_call.1} parent=51 // pred_check_branch
                %630 = sbr.rel (0) target = $region74
              $region73: #{tpu_custom_call.1} parent=51 // pred_region
                %s631 = sshrl.u32 %s558, 3
                // While loop
                $region75: #{tpu_custom_call.1} parent=73 // loop_pre_header
                  _
                $region76: #{tpu_custom_call.1} parent=73 // loop_header
                  %s633 = sphi 0, %s635
                  %p634 = scmp.ge.s32.totalorder %s633, %s631
                  %s638 = sphi 0, %s659
                  %s639 = sphi %s551, %s662
                  %s640 = sphi %s562, %s663
                $region77: #{tpu_custom_call.1} parent=73 // loop_header_branch
                  %637 = sbr.rel (%p634) target = $region81
                $region78: #{tpu_custom_call.1} parent=73 // loop_body
                  %v641 = vld [vmem:[%s639] sm:$0xff]
                  %642 = vst [vmem:[%s640] sm:$0xff] %v641
                  %v643 = vld [vmem:[%s639 + $0x8] sm:$0xff]
                  %644 = vst [vmem:[%s640 + $0x8] sm:$0xff] %v643
                  %v645 = vld [vmem:[%s639 + $0x10] sm:$0xff]
                  %646 = vst [vmem:[%s640 + $0x10] sm:$0xff] %v645
                  %v647 = vld [vmem:[%s639 + $0x18] sm:$0xff]
                  %648 = vst [vmem:[%s640 + $0x18] sm:$0xff] %v647
                  %v649 = vld [vmem:[%s639 + $0x20] sm:$0xff]
                  %650 = vst [vmem:[%s640 + $0x20] sm:$0xff] %v649
                  %v651 = vld [vmem:[%s639 + $0x28] sm:$0xff]
                  %652 = vst [vmem:[%s640 + $0x28] sm:$0xff] %v651
                  %v653 = vld [vmem:[%s639 + $0x30] sm:$0xff]
                  %654 = vst [vmem:[%s640 + $0x30] sm:$0xff] %v653
                  %v655 = vld [vmem:[%s639 + $0x38] sm:$0xff]
                  %656 = vst [vmem:[%s640 + $0x38] sm:$0xff] %v655
                  %s657 = sadd.s32 1, %s638
                  %p658 = scmp.ge.s32.totalorder %s657, %s631
                  %s659 = scalar_select %p658, 0, %s657
                  %s660 = smul.u32 %s659, 64
                  %s661 = smul.u32 %s659, 64
                  %s662 = scalar_lea.vmem %s551, %s660 [#allocation2]
                  %s663 = scalar_lea.vmem %s562, %s661
                $region79: #{tpu_custom_call.1} parent=73 // loop_footer
                  %s635 = sadd.s32 %s633, 1
                $region80: #{tpu_custom_call.1} parent=73 // loop_footer_branch
                  %632 = sbr.rel target = $region76
                $region81: #{tpu_custom_call.1} parent=73 // loop_exit
                  _
                %s664 = sshrl.u32 %s558, 3
                %s665 = sand.u32 %s558, 7
                %s666 = smul.u32 %s664, 8
                %s667 = smul.u32 8, %s666
                %s668 = scalar_lea.vmem %s551, %s667 [#allocation2]
                %s669 = smul.u32 8, %s666
                %s670 = scalar_lea.vmem %s562, %s669
                // While loop
                $region82: #{tpu_custom_call.1} parent=73 // loop_pre_header
                  _
                $region83: #{tpu_custom_call.1} parent=73 // loop_header
                  %s672 = sphi 0, %s674
                  %p673 = scmp.ge.s32.totalorder %s672, %s665
                  %s677 = sphi 0, %s684
                  %s678 = sphi %s668, %s687
                  %s679 = sphi %s670, %s688
                $region84: #{tpu_custom_call.1} parent=73 // loop_header_branch
                  %676 = sbr.rel (%p673) target = $region88
                $region85: #{tpu_custom_call.1} parent=73 // loop_body
                  %v680 = vld [vmem:[%s678] sm:$0xff]
                  %681 = vst [vmem:[%s679] sm:$0xff] %v680
                  %s682 = sadd.s32 1, %s677
                  %p683 = scmp.ge.s32.totalorder %s682, %s665
                  %s684 = scalar_select %p683, 0, %s682
                  %s685 = smul.u32 %s684, 8
                  %s686 = smul.u32 %s684, 8
                  %s687 = scalar_lea.vmem %s668, %s685 [#allocation2]
                  %s688 = scalar_lea.vmem %s670, %s686
                $region86: #{tpu_custom_call.1} parent=73 // loop_footer
                  %s674 = sadd.s32 %s672, 1
                $region87: #{tpu_custom_call.1} parent=73 // loop_footer_branch
                  %671 = sbr.rel target = $region83
                $region88: #{tpu_custom_call.1} parent=73 // loop_exit
                  _
              $region74: #{tpu_custom_call.1} parent=51 // pred_fallthru
                _
              // Predicated region
              $region89: #{tpu_custom_call.1} parent=51 // pred_check
                _
              $region90: #{tpu_custom_call.1} parent=51 // pred_check_branch
                %690 = sbr.rel target = $region92
              $region91: #{tpu_custom_call.1} parent=51 // pred_region
                _
              $region92: #{tpu_custom_call.1} parent=51 // pred_fallthru
                _
            $region52: #{tpu_custom_call.1} parent=47 // pred_fallthru
              _
            // Predicated region
            $region53: #{tpu_custom_call.1} parent=47 // pred_check
              _
            $region54: #{tpu_custom_call.1} parent=47 // pred_check_branch
              %569 = sbr.rel target = $region56
            $region55: #{tpu_custom_call.1} parent=47 // pred_region
              %s571 = sshrl.u32 %s558, 3
              // While loop
              $region57: #{tpu_custom_call.1} parent=55 // loop_pre_header
                _
              $region58: #{tpu_custom_call.1} parent=55 // loop_header
                %s573 = sphi 0, %s575
                %p574 = scmp.ge.s32.totalorder %s573, %s571
                %s578 = sphi 0, %s599
                %s579 = sphi %s551, %s602
                %s580 = sphi %s562, %s603
              $region59: #{tpu_custom_call.1} parent=55 // loop_header_branch
                %577 = sbr.rel (%p574) target = $region63
              $region60: #{tpu_custom_call.1} parent=55 // loop_body
                %v581 = vld [vmem:[%s579] sm:$0xff]
                %582 = vst [vmem:[%s580] sm:$0xff] %v581
                %v583 = vld [vmem:[%s579 + $0x8] sm:$0xff]
                %584 = vst [vmem:[%s580 + $0x8] sm:$0xff] %v583
                %v585 = vld [vmem:[%s579 + $0x10] sm:$0xff]
                %586 = vst [vmem:[%s580 + $0x10] sm:$0xff] %v585
                %v587 = vld [vmem:[%s579 + $0x18] sm:$0xff]
                %588 = vst [vmem:[%s580 + $0x18] sm:$0xff] %v587
                %v589 = vld [vmem:[%s579 + $0x20] sm:$0xff]
                %590 = vst [vmem:[%s580 + $0x20] sm:$0xff] %v589
                %v591 = vld [vmem:[%s579 + $0x28] sm:$0xff]
                %592 = vst [vmem:[%s580 + $0x28] sm:$0xff] %v591
                %v593 = vld [vmem:[%s579 + $0x30] sm:$0xff]
                %594 = vst [vmem:[%s580 + $0x30] sm:$0xff] %v593
                %v595 = vld [vmem:[%s579 + $0x38] sm:$0xff]
                %596 = vst [vmem:[%s580 + $0x38] sm:$0xff] %v595
                %s597 = sadd.s32 1, %s578
                %p598 = scmp.ge.s32.totalorder %s597, %s571
                %s599 = scalar_select %p598, 0, %s597
                %s600 = smul.u32 %s599, 64
                %s601 = smul.u32 %s599, 64
                %s602 = scalar_lea.vmem %s551, %s600 [#allocation2]
                %s603 = scalar_lea.vmem %s562, %s601
              $region61: #{tpu_custom_call.1} parent=55 // loop_footer
                %s575 = sadd.s32 %s573, 1
              $region62: #{tpu_custom_call.1} parent=55 // loop_footer_branch
                %572 = sbr.rel target = $region58
              $region63: #{tpu_custom_call.1} parent=55 // loop_exit
                _
              %s604 = sshrl.u32 %s558, 3
              %s605 = sand.u32 %s558, 7
              %s606 = smul.u32 %s604, 8
              %s607 = smul.u32 8, %s606
              %s608 = scalar_lea.vmem %s551, %s607 [#allocation2]
              %s609 = smul.u32 8, %s606
              %s610 = scalar_lea.vmem %s562, %s609
              // While loop
              $region64: #{tpu_custom_call.1} parent=55 // loop_pre_header
                _
              $region65: #{tpu_custom_call.1} parent=55 // loop_header
                %s612 = sphi 0, %s614
                %p613 = scmp.ge.s32.totalorder %s612, %s605
                %s617 = sphi 0, %s624
                %s618 = sphi %s608, %s627
                %s619 = sphi %s610, %s628
              $region66: #{tpu_custom_call.1} parent=55 // loop_header_branch
                %616 = sbr.rel (%p613) target = $region70
              $region67: #{tpu_custom_call.1} parent=55 // loop_body
                %v620 = vld [vmem:[%s618] sm:$0xff]
                %621 = vst [vmem:[%s619] sm:$0xff] %v620
                %s622 = sadd.s32 1, %s617
                %p623 = scmp.ge.s32.totalorder %s622, %s605
                %s624 = scalar_select %p623, 0, %s622
                %s625 = smul.u32 %s624, 8
                %s626 = smul.u32 %s624, 8
                %s627 = scalar_lea.vmem %s608, %s625 [#allocation2]
                %s628 = scalar_lea.vmem %s610, %s626
              $region68: #{tpu_custom_call.1} parent=55 // loop_footer
                %s614 = sadd.s32 %s612, 1
              $region69: #{tpu_custom_call.1} parent=55 // loop_footer_branch
                %611 = sbr.rel target = $region65
              $region70: #{tpu_custom_call.1} parent=55 // loop_exit
                _
            $region56: #{tpu_custom_call.1} parent=47 // pred_fallthru
              _
          $region48: #{tpu_custom_call.1} parent=43 // pred_fallthru
            _
          %691 = vnop
        $region44: #{tpu_custom_call.1} parent=39 // pred_fallthru
          _
      $region40: #{tpu_custom_call.1} parent=5 // pred_fallthru
        _
      %p692 = scmp.le.s32.totalorder 2, %s11
      // Predicated region
      $region93: #{tpu_custom_call.1} parent=5 // pred_check
        %p693 = pneg %p692
      $region94: #{tpu_custom_call.1} parent=5 // pred_check_branch
        %695 = sbr.rel (%p693) target = $region96
      $region95: #{tpu_custom_call.1} parent=5 // pred_region
        %s696 = ssub.s32 %s11, 2
        // Predicated region
        $region97: #{tpu_custom_call.1} parent=95 // pred_check
          %p697 = pneg %p150
        $region98: #{tpu_custom_call.1} parent=95 // pred_check_branch
          %699 = sbr.rel (%p697) target = $region100
        $region99: #{tpu_custom_call.1} parent=95 // pred_region
          %s700 = sand.u32 %s135, 1
          %s701 = sand.u32 %s135, 1
          %s702 = smul.addr %s701, 64
          %s703 = scalar_lea.vmem [#allocation2], %s702
        $region100: #{tpu_custom_call.1} parent=95 // pred_fallthru
          _
      $region96: #{tpu_custom_call.1} parent=5 // pred_fallthru
        _
    $region6: #{tpu_custom_call.1} parent=1 // loop_footer
      %s15 = sadd.s32 1, %s11
    $region7: #{tpu_custom_call.1} parent=1 // loop_footer_branch
      %10 = sbr.rel target = $region3
    $region8: #{tpu_custom_call.1} parent=1 // loop_exit
      _

</llo_original>
